<compile_context>
chip_gen: v7x
topology: tpu7x:2x2x1
jax: 0.10.0
libtpu: 0.0.40
codegen_flags: <defaults>
</compile_context>

<pallas_src>
import functools

import jax
import jax.numpy as jnp
from jax.experimental import pallas as pl
from jax.experimental.pallas import tpu as pltpu

IN_FEATURES = 4
HIDDEN = 8


def _round_up(n, m):
    return ((n + m - 1) // m) * m


def mlp_kernel(w1_ref, b1_ref, w2_ref, b2_ref, x_ref, o_ref):
    """x_ref: (4, TB) f32 tile in VMEM; weights/biases are scalars in SMEM.

    Computes o[0, :] = W2 @ relu(W1 @ x + b1) + b2 entirely on the VPU
    (scalar-splat * vector fused multiply-adds; no MXU pushes).
    """
    acc = jnp.zeros(o_ref.shape, jnp.float32)                 # (1, TB)
    for j in range(HIDDEN):                                   # fully unrolled: 8*(4+1) FMAs
        hj = b1_ref[j] + w1_ref[0, j] * x_ref[0:1, :]
        for k in range(1, IN_FEATURES):
            hj = hj + w1_ref[k, j] * x_ref[k:k + 1, :]
        acc = acc + w2_ref[j] * jnp.maximum(hj, 0.0)          # fused ReLU
    o_ref[...] = acc + b2_ref[0]


@functools.partial(jax.jit, static_argnames=("tile_batch",))
def simple_house_net(x, w1, b1, w2, b2, *, tile_batch=2048):
    """Forward pass of SimpleHouseNet.

    x:  (B, 4) float32
    w1: (4, 8)  (in, out)     b1: (1, 8)
    w2: (8, 1)  (in, out)     b2: (1, 1)
    returns (B, 1) float32
    """
    B = x.shape[0]

    # Batch-in-lanes layout: (features, batch), padded to a multiple of the tile.
    tb = min(tile_batch, _round_up(B, 128))
    bp = _round_up(B, tb)
    xt = x.T                                                  # (4, B)
    if bp != B:
        xt = jnp.pad(xt, ((0, 0), (0, bp - B)))

    smem = pl.BlockSpec(memory_space=pltpu.MemorySpace.SMEM)

    out = pl.pallas_call(
        mlp_kernel,
        out_shape=jax.ShapeDtypeStruct((1, bp), jnp.float32),
        grid=(bp // tb,),
        in_specs=[
            smem,                                              # w1 (4, 8) scalars
            smem,                                              # b1 (8,)
            smem,                                              # w2 (8,)
            smem,                                              # b2 (1,)
            pl.BlockSpec((IN_FEATURES, tb), lambda i: (0, i)), # x tile (4, TB), lane-dense
        ],
        out_specs=pl.BlockSpec((1, tb), lambda i: (0, i)),     # lane-dense output tile
        compiler_params=pltpu.CompilerParams(
            dimension_semantics=("parallel",)),                # v7x: shard tiles over 2 TCs
    )(w1, b1.reshape(HIDDEN), w2.reshape(HIDDEN), b2.reshape(1), xt)

    return out[0, :B].reshape(B, 1)


def init_params(key):
    # Deterministic init mimicking nn.Linear's uniform(-1/sqrt(fan_in), 1/sqrt(fan_in)).
    k1, k2, k3, k4 = jax.random.split(key, 4)
    bound1 = 1.0 / jnp.sqrt(4.0)
    bound2 = 1.0 / jnp.sqrt(8.0)
    w1 = jax.random.uniform(k1, (4, 8), jnp.float32, -bound1, bound1)   # (in, out)
    b1 = jax.random.uniform(k2, (1, 8), jnp.float32, -bound1, bound1)
    w2 = jax.random.uniform(k3, (8, 1), jnp.float32, -bound2, bound2)   # (in, out)
    b2 = jax.random.uniform(k4, (1, 1), jnp.float32, -bound2, bound2)
    return w1, b1, w2, b2


def reference(x, w1, b1, w2, b2):
    # Same math as the PyTorch forward (weights pre-transposed to (in, out)).
    return jnp.maximum(x @ w1 + b1, 0.0) @ w2 + b2


if __name__ == "__main__":
    key = jax.random.PRNGKey(0)
    kx, kx2, kp = jax.random.split(key, 3)
    w1, b1, w2, b2 = init_params(kp)

    # Small batch (pads internally to one 128-lane tile).
    x_small = jax.random.normal(kx, (8, 4), dtype=jnp.float32)
    out_small = jax.block_until_ready(simple_house_net(x_small, w1, b1, w2, b2))
    assert out_small.shape == (8, 1)
    assert jnp.allclose(out_small, reference(x_small, w1, b1, w2, b2),
                        atol=1e-5, rtol=1e-5)

    # Ragged batch + small tile: exercises multi-tile pipelined grid and padding.
    x_big = jax.random.normal(kx2, (300, 4), dtype=jnp.float32)
    out_big = jax.block_until_ready(
        simple_house_net(x_big, w1, b1, w2, b2, tile_batch=256))
    assert out_big.shape == (300, 1)
    assert jnp.allclose(out_big, reference(x_big, w1, b1, w2, b2),
                        atol=1e-5, rtol=1e-5)

    print("KERNEL_OK")
</pallas_src>

<mosaic_0001>
module attributes {stable_mosaic.version = 11 : i64} {
  func.func @mlp_kernel(%arg0: i32, %arg1: memref<4x8xf32, #tpu.memory_space<smem>>, %arg2: memref<8xf32, #tpu.memory_space<smem>>, %arg3: memref<8xf32, #tpu.memory_space<smem>>, %arg4: memref<1xf32, #tpu.memory_space<smem>>, %arg5: memref<4x128xf32, #tpu.memory_space<vmem>>, %arg6: memref<1x128xf32, #tpu.memory_space<vmem>>) attributes {dimension_semantics = [#tpu.dimension_semantics<parallel>], iteration_bounds = array<i64: 1>, scalar_prefetch = 0 : i64, scratch_operands = 0 : i64, tpu.core_type = #tpu.core_type<tc>, window_params = [{transform_indices = @transform_0, window_bounds = array<i64: 4, 8>}, {transform_indices = @transform_1, window_bounds = array<i64: 8>}, {transform_indices = @transform_2, window_bounds = array<i64: 8>}, {transform_indices = @transform_3, window_bounds = array<i64: 1>}, {transform_indices = @transform_4, window_bounds = array<i64: 4, 128>}, {transform_indices = @transform_5, window_bounds = array<i64: 1, 128>}]} {
    %cst = arith.constant 0.000000e+00 : f32
    %0 = vector.broadcast %cst : f32 to vector<1x128xf32>
    %c0 = arith.constant 0 : index
    %1 = memref.load %arg2[%c0] : memref<8xf32, #tpu.memory_space<smem>>
    %c0_0 = arith.constant 0 : index
    %c0_1 = arith.constant 0 : index
    %2 = memref.load %arg1[%c0_0, %c0_1] : memref<4x8xf32, #tpu.memory_space<smem>>
    %c0_2 = arith.constant 0 : index
    %c0_3 = arith.constant 0 : index
    %3 = vector.load %arg5[%c0_2, %c0_3] : memref<4x128xf32, #tpu.memory_space<vmem>>, vector<1x128xf32>
    %4 = vector.broadcast %2 : f32 to vector<1x128xf32>
    %5 = arith.mulf %4, %3 : vector<1x128xf32>
    %6 = vector.broadcast %1 : f32 to vector<1x128xf32>
    %7 = arith.addf %6, %5 : vector<1x128xf32>
    %c1 = arith.constant 1 : index
    %c0_4 = arith.constant 0 : index
    %8 = memref.load %arg1[%c1, %c0_4] : memref<4x8xf32, #tpu.memory_space<smem>>
    %c1_5 = arith.constant 1 : index
    %c0_6 = arith.constant 0 : index
    %9 = vector.load %arg5[%c1_5, %c0_6] : memref<4x128xf32, #tpu.memory_space<vmem>>, vector<1x128xf32>
    %10 = vector.broadcast %8 : f32 to vector<1x128xf32>
    %11 = arith.mulf %10, %9 : vector<1x128xf32>
    %12 = arith.addf %7, %11 : vector<1x128xf32>
    %c2 = arith.constant 2 : index
    %c0_7 = arith.constant 0 : index
    %13 = memref.load %arg1[%c2, %c0_7] : memref<4x8xf32, #tpu.memory_space<smem>>
    %c2_8 = arith.constant 2 : index
    %c0_9 = arith.constant 0 : index
    %14 = vector.load %arg5[%c2_8, %c0_9] : memref<4x128xf32, #tpu.memory_space<vmem>>, vector<1x128xf32>
    %15 = vector.broadcast %13 : f32 to vector<1x128xf32>
    %16 = arith.mulf %15, %14 : vector<1x128xf32>
    %17 = arith.addf %12, %16 : vector<1x128xf32>
    %c3 = arith.constant 3 : index
    %c0_10 = arith.constant 0 : index
    %18 = memref.load %arg1[%c3, %c0_10] : memref<4x8xf32, #tpu.memory_space<smem>>
    %c3_11 = arith.constant 3 : index
    %c0_12 = arith.constant 0 : index
    %19 = vector.load %arg5[%c3_11, %c0_12] : memref<4x128xf32, #tpu.memory_space<vmem>>, vector<1x128xf32>
    %20 = vector.broadcast %18 : f32 to vector<1x128xf32>
    %21 = arith.mulf %20, %19 : vector<1x128xf32>
    %22 = arith.addf %17, %21 : vector<1x128xf32>
    %c0_13 = arith.constant 0 : index
    %23 = memref.load %arg3[%c0_13] : memref<8xf32, #tpu.memory_space<smem>>
    %cst_14 = arith.constant 0.000000e+00 : f32
    %24 = vector.broadcast %cst_14 : f32 to vector<1x128xf32>
    %25 = arith.maximumf %22, %24 : vector<1x128xf32>
    %26 = vector.broadcast %23 : f32 to vector<1x128xf32>
    %27 = arith.mulf %26, %25 : vector<1x128xf32>
    %28 = arith.addf %0, %27 : vector<1x128xf32>
    %c1_15 = arith.constant 1 : index
    %29 = memref.load %arg2[%c1_15] : memref<8xf32, #tpu.memory_space<smem>>
    %c0_16 = arith.constant 0 : index
    %c1_17 = arith.constant 1 : index
    %30 = memref.load %arg1[%c0_16, %c1_17] : memref<4x8xf32, #tpu.memory_space<smem>>
    %c0_18 = arith.constant 0 : index
    %c0_19 = arith.constant 0 : index
    %31 = vector.load %arg5[%c0_18, %c0_19] : memref<4x128xf32, #tpu.memory_space<vmem>>, vector<1x128xf32>
    %32 = vector.broadcast %30 : f32 to vector<1x128xf32>
    %33 = arith.mulf %32, %31 : vector<1x128xf32>
    %34 = vector.broadcast %29 : f32 to vector<1x128xf32>
    %35 = arith.addf %34, %33 : vector<1x128xf32>
    %c1_20 = arith.constant 1 : index
    %c1_21 = arith.constant 1 : index
    %36 = memref.load %arg1[%c1_20, %c1_21] : memref<4x8xf32, #tpu.memory_space<smem>>
    %c1_22 = arith.constant 1 : index
    %c0_23 = arith.constant 0 : index
    %37 = vector.load %arg5[%c1_22, %c0_23] : memref<4x128xf32, #tpu.memory_space<vmem>>, vector<1x128xf32>
    %38 = vector.broadcast %36 : f32 to vector<1x128xf32>
    %39 = arith.mulf %38, %37 : vector<1x128xf32>
    %40 = arith.addf %35, %39 : vector<1x128xf32>
    %c2_24 = arith.constant 2 : index
    %c1_25 = arith.constant 1 : index
    %41 = memref.load %arg1[%c2_24, %c1_25] : memref<4x8xf32, #tpu.memory_space<smem>>
    %c2_26 = arith.constant 2 : index
    %c0_27 = arith.constant 0 : index
    %42 = vector.load %arg5[%c2_26, %c0_27] : memref<4x128xf32, #tpu.memory_space<vmem>>, vector<1x128xf32>
    %43 = vector.broadcast %41 : f32 to vector<1x128xf32>
    %44 = arith.mulf %43, %42 : vector<1x128xf32>
    %45 = arith.addf %40, %44 : vector<1x128xf32>
    %c3_28 = arith.constant 3 : index
    %c1_29 = arith.constant 1 : index
    %46 = memref.load %arg1[%c3_28, %c1_29] : memref<4x8xf32, #tpu.memory_space<smem>>
    %c3_30 = arith.constant 3 : index
    %c0_31 = arith.constant 0 : index
    %47 = vector.load %arg5[%c3_30, %c0_31] : memref<4x128xf32, #tpu.memory_space<vmem>>, vector<1x128xf32>
    %48 = vector.broadcast %46 : f32 to vector<1x128xf32>
    %49 = arith.mulf %48, %47 : vector<1x128xf32>
    %50 = arith.addf %45, %49 : vector<1x128xf32>
    %c1_32 = arith.constant 1 : index
    %51 = memref.load %arg3[%c1_32] : memref<8xf32, #tpu.memory_space<smem>>
    %cst_33 = arith.constant 0.000000e+00 : f32
    %52 = vector.broadcast %cst_33 : f32 to vector<1x128xf32>
    %53 = arith.maximumf %50, %52 : vector<1x128xf32>
    %54 = vector.broadcast %51 : f32 to vector<1x128xf32>
    %55 = arith.mulf %54, %53 : vector<1x128xf32>
    %56 = arith.addf %28, %55 : vector<1x128xf32>
    %c2_34 = arith.constant 2 : index
    %57 = memref.load %arg2[%c2_34] : memref<8xf32, #tpu.memory_space<smem>>
    %c0_35 = arith.constant 0 : index
    %c2_36 = arith.constant 2 : index
    %58 = memref.load %arg1[%c0_35, %c2_36] : memref<4x8xf32, #tpu.memory_space<smem>>
    %c0_37 = arith.constant 0 : index
    %c0_38 = arith.constant 0 : index
    %59 = vector.load %arg5[%c0_37, %c0_38] : memref<4x128xf32, #tpu.memory_space<vmem>>, vector<1x128xf32>
    %60 = vector.broadcast %58 : f32 to vector<1x128xf32>
    %61 = arith.mulf %60, %59 : vector<1x128xf32>
    %62 = vector.broadcast %57 : f32 to vector<1x128xf32>
    %63 = arith.addf %62, %61 : vector<1x128xf32>
    %c1_39 = arith.constant 1 : index
    %c2_40 = arith.constant 2 : index
    %64 = memref.load %arg1[%c1_39, %c2_40] : memref<4x8xf32, #tpu.memory_space<smem>>
    %c1_41 = arith.constant 1 : index
    %c0_42 = arith.constant 0 : index
    %65 = vector.load %arg5[%c1_41, %c0_42] : memref<4x128xf32, #tpu.memory_space<vmem>>, vector<1x128xf32>
    %66 = vector.broadcast %64 : f32 to vector<1x128xf32>
    %67 = arith.mulf %66, %65 : vector<1x128xf32>
    %68 = arith.addf %63, %67 : vector<1x128xf32>
    %c2_43 = arith.constant 2 : index
    %c2_44 = arith.constant 2 : index
    %69 = memref.load %arg1[%c2_43, %c2_44] : memref<4x8xf32, #tpu.memory_space<smem>>
    %c2_45 = arith.constant 2 : index
    %c0_46 = arith.constant 0 : index
    %70 = vector.load %arg5[%c2_45, %c0_46] : memref<4x128xf32, #tpu.memory_space<vmem>>, vector<1x128xf32>
    %71 = vector.broadcast %69 : f32 to vector<1x128xf32>
    %72 = arith.mulf %71, %70 : vector<1x128xf32>
    %73 = arith.addf %68, %72 : vector<1x128xf32>
    %c3_47 = arith.constant 3 : index
    %c2_48 = arith.constant 2 : index
    %74 = memref.load %arg1[%c3_47, %c2_48] : memref<4x8xf32, #tpu.memory_space<smem>>
    %c3_49 = arith.constant 3 : index
    %c0_50 = arith.constant 0 : index
    %75 = vector.load %arg5[%c3_49, %c0_50] : memref<4x128xf32, #tpu.memory_space<vmem>>, vector<1x128xf32>
    %76 = vector.broadcast %74 : f32 to vector<1x128xf32>
    %77 = arith.mulf %76, %75 : vector<1x128xf32>
    %78 = arith.addf %73, %77 : vector<1x128xf32>
    %c2_51 = arith.constant 2 : index
    %79 = memref.load %arg3[%c2_51] : memref<8xf32, #tpu.memory_space<smem>>
    %cst_52 = arith.constant 0.000000e+00 : f32
    %80 = vector.broadcast %cst_52 : f32 to vector<1x128xf32>
    %81 = arith.maximumf %78, %80 : vector<1x128xf32>
    %82 = vector.broadcast %79 : f32 to vector<1x128xf32>
    %83 = arith.mulf %82, %81 : vector<1x128xf32>
    %84 = arith.addf %56, %83 : vector<1x128xf32>
    %c3_53 = arith.constant 3 : index
    %85 = memref.load %arg2[%c3_53] : memref<8xf32, #tpu.memory_space<smem>>
    %c0_54 = arith.constant 0 : index
    %c3_55 = arith.constant 3 : index
    %86 = memref.load %arg1[%c0_54, %c3_55] : memref<4x8xf32, #tpu.memory_space<smem>>
    %c0_56 = arith.constant 0 : index
    %c0_57 = arith.constant 0 : index
    %87 = vector.load %arg5[%c0_56, %c0_57] : memref<4x128xf32, #tpu.memory_space<vmem>>, vector<1x128xf32>
    %88 = vector.broadcast %86 : f32 to vector<1x128xf32>
    %89 = arith.mulf %88, %87 : vector<1x128xf32>
    %90 = vector.broadcast %85 : f32 to vector<1x128xf32>
    %91 = arith.addf %90, %89 : vector<1x128xf32>
    %c1_58 = arith.constant 1 : index
    %c3_59 = arith.constant 3 : index
    %92 = memref.load %arg1[%c1_58, %c3_59] : memref<4x8xf32, #tpu.memory_space<smem>>
    %c1_60 = arith.constant 1 : index
    %c0_61 = arith.constant 0 : index
    %93 = vector.load %arg5[%c1_60, %c0_61] : memref<4x128xf32, #tpu.memory_space<vmem>>, vector<1x128xf32>
    %94 = vector.broadcast %92 : f32 to vector<1x128xf32>
    %95 = arith.mulf %94, %93 : vector<1x128xf32>
    %96 = arith.addf %91, %95 : vector<1x128xf32>
    %c2_62 = arith.constant 2 : index
    %c3_63 = arith.constant 3 : index
    %97 = memref.load %arg1[%c2_62, %c3_63] : memref<4x8xf32, #tpu.memory_space<smem>>
    %c2_64 = arith.constant 2 : index
    %c0_65 = arith.constant 0 : index
    %98 = vector.load %arg5[%c2_64, %c0_65] : memref<4x128xf32, #tpu.memory_space<vmem>>, vector<1x128xf32>
    %99 = vector.broadcast %97 : f32 to vector<1x128xf32>
    %100 = arith.mulf %99, %98 : vector<1x128xf32>
    %101 = arith.addf %96, %100 : vector<1x128xf32>
    %c3_66 = arith.constant 3 : index
    %c3_67 = arith.constant 3 : index
    %102 = memref.load %arg1[%c3_66, %c3_67] : memref<4x8xf32, #tpu.memory_space<smem>>
    %c3_68 = arith.constant 3 : index
    %c0_69 = arith.constant 0 : index
    %103 = vector.load %arg5[%c3_68, %c0_69] : memref<4x128xf32, #tpu.memory_space<vmem>>, vector<1x128xf32>
    %104 = vector.broadcast %102 : f32 to vector<1x128xf32>
    %105 = arith.mulf %104, %103 : vector<1x128xf32>
    %106 = arith.addf %101, %105 : vector<1x128xf32>
    %c3_70 = arith.constant 3 : index
    %107 = memref.load %arg3[%c3_70] : memref<8xf32, #tpu.memory_space<smem>>
    %cst_71 = arith.constant 0.000000e+00 : f32
    %108 = vector.broadcast %cst_71 : f32 to vector<1x128xf32>
    %109 = arith.maximumf %106, %108 : vector<1x128xf32>
    %110 = vector.broadcast %107 : f32 to vector<1x128xf32>
    %111 = arith.mulf %110, %109 : vector<1x128xf32>
    %112 = arith.addf %84, %111 : vector<1x128xf32>
    %c4 = arith.constant 4 : index
    %113 = memref.load %arg2[%c4] : memref<8xf32, #tpu.memory_space<smem>>
    %c0_72 = arith.constant 0 : index
    %c4_73 = arith.constant 4 : index
    %114 = memref.load %arg1[%c0_72, %c4_73] : memref<4x8xf32, #tpu.memory_space<smem>>
    %c0_74 = arith.constant 0 : index
    %c0_75 = arith.constant 0 : index
    %115 = vector.load %arg5[%c0_74, %c0_75] : memref<4x128xf32, #tpu.memory_space<vmem>>, vector<1x128xf32>
    %116 = vector.broadcast %114 : f32 to vector<1x128xf32>
    %117 = arith.mulf %116, %115 : vector<1x128xf32>
    %118 = vector.broadcast %113 : f32 to vector<1x128xf32>
    %119 = arith.addf %118, %117 : vector<1x128xf32>
    %c1_76 = arith.constant 1 : index
    %c4_77 = arith.constant 4 : index
    %120 = memref.load %arg1[%c1_76, %c4_77] : memref<4x8xf32, #tpu.memory_space<smem>>
    %c1_78 = arith.constant 1 : index
    %c0_79 = arith.constant 0 : index
    %121 = vector.load %arg5[%c1_78, %c0_79] : memref<4x128xf32, #tpu.memory_space<vmem>>, vector<1x128xf32>
    %122 = vector.broadcast %120 : f32 to vector<1x128xf32>
    %123 = arith.mulf %122, %121 : vector<1x128xf32>
    %124 = arith.addf %119, %123 : vector<1x128xf32>
    %c2_80 = arith.constant 2 : index
    %c4_81 = arith.constant 4 : index
    %125 = memref.load %arg1[%c2_80, %c4_81] : memref<4x8xf32, #tpu.memory_space<smem>>
    %c2_82 = arith.constant 2 : index
    %c0_83 = arith.constant 0 : index
    %126 = vector.load %arg5[%c2_82, %c0_83] : memref<4x128xf32, #tpu.memory_space<vmem>>, vector<1x128xf32>
    %127 = vector.broadcast %125 : f32 to vector<1x128xf32>
    %128 = arith.mulf %127, %126 : vector<1x128xf32>
    %129 = arith.addf %124, %128 : vector<1x128xf32>
    %c3_84 = arith.constant 3 : index
    %c4_85 = arith.constant 4 : index
    %130 = memref.load %arg1[%c3_84, %c4_85] : memref<4x8xf32, #tpu.memory_space<smem>>
    %c3_86 = arith.constant 3 : index
    %c0_87 = arith.constant 0 : index
    %131 = vector.load %arg5[%c3_86, %c0_87] : memref<4x128xf32, #tpu.memory_space<vmem>>, vector<1x128xf32>
    %132 = vector.broadcast %130 : f32 to vector<1x128xf32>
    %133 = arith.mulf %132, %131 : vector<1x128xf32>
    %134 = arith.addf %129, %133 : vector<1x128xf32>
    %c4_88 = arith.constant 4 : index
    %135 = memref.load %arg3[%c4_88] : memref<8xf32, #tpu.memory_space<smem>>
    %cst_89 = arith.constant 0.000000e+00 : f32
    %136 = vector.broadcast %cst_89 : f32 to vector<1x128xf32>
    %137 = arith.maximumf %134, %136 : vector<1x128xf32>
    %138 = vector.broadcast %135 : f32 to vector<1x128xf32>
    %139 = arith.mulf %138, %137 : vector<1x128xf32>
    %140 = arith.addf %112, %139 : vector<1x128xf32>
    %c5 = arith.constant 5 : index
    %141 = memref.load %arg2[%c5] : memref<8xf32, #tpu.memory_space<smem>>
    %c0_90 = arith.constant 0 : index
    %c5_91 = arith.constant 5 : index
    %142 = memref.load %arg1[%c0_90, %c5_91] : memref<4x8xf32, #tpu.memory_space<smem>>
    %c0_92 = arith.constant 0 : index
    %c0_93 = arith.constant 0 : index
    %143 = vector.load %arg5[%c0_92, %c0_93] : memref<4x128xf32, #tpu.memory_space<vmem>>, vector<1x128xf32>
    %144 = vector.broadcast %142 : f32 to vector<1x128xf32>
    %145 = arith.mulf %144, %143 : vector<1x128xf32>
    %146 = vector.broadcast %141 : f32 to vector<1x128xf32>
    %147 = arith.addf %146, %145 : vector<1x128xf32>
    %c1_94 = arith.constant 1 : index
    %c5_95 = arith.constant 5 : index
    %148 = memref.load %arg1[%c1_94, %c5_95] : memref<4x8xf32, #tpu.memory_space<smem>>
    %c1_96 = arith.constant 1 : index
    %c0_97 = arith.constant 0 : index
    %149 = vector.load %arg5[%c1_96, %c0_97] : memref<4x128xf32, #tpu.memory_space<vmem>>, vector<1x128xf32>
    %150 = vector.broadcast %148 : f32 to vector<1x128xf32>
    %151 = arith.mulf %150, %149 : vector<1x128xf32>
    %152 = arith.addf %147, %151 : vector<1x128xf32>
    %c2_98 = arith.constant 2 : index
    %c5_99 = arith.constant 5 : index
    %153 = memref.load %arg1[%c2_98, %c5_99] : memref<4x8xf32, #tpu.memory_space<smem>>
    %c2_100 = arith.constant 2 : index
    %c0_101 = arith.constant 0 : index
    %154 = vector.load %arg5[%c2_100, %c0_101] : memref<4x128xf32, #tpu.memory_space<vmem>>, vector<1x128xf32>
    %155 = vector.broadcast %153 : f32 to vector<1x128xf32>
    %156 = arith.mulf %155, %154 : vector<1x128xf32>
    %157 = arith.addf %152, %156 : vector<1x128xf32>
    %c3_102 = arith.constant 3 : index
    %c5_103 = arith.constant 5 : index
    %158 = memref.load %arg1[%c3_102, %c5_103] : memref<4x8xf32, #tpu.memory_space<smem>>
    %c3_104 = arith.constant 3 : index
    %c0_105 = arith.constant 0 : index
    %159 = vector.load %arg5[%c3_104, %c0_105] : memref<4x128xf32, #tpu.memory_space<vmem>>, vector<1x128xf32>
    %160 = vector.broadcast %158 : f32 to vector<1x128xf32>
    %161 = arith.mulf %160, %159 : vector<1x128xf32>
    %162 = arith.addf %157, %161 : vector<1x128xf32>
    %c5_106 = arith.constant 5 : index
    %163 = memref.load %arg3[%c5_106] : memref<8xf32, #tpu.memory_space<smem>>
    %cst_107 = arith.constant 0.000000e+00 : f32
    %164 = vector.broadcast %cst_107 : f32 to vector<1x128xf32>
    %165 = arith.maximumf %162, %164 : vector<1x128xf32>
    %166 = vector.broadcast %163 : f32 to vector<1x128xf32>
    %167 = arith.mulf %166, %165 : vector<1x128xf32>
    %168 = arith.addf %140, %167 : vector<1x128xf32>
    %c6 = arith.constant 6 : index
    %169 = memref.load %arg2[%c6] : memref<8xf32, #tpu.memory_space<smem>>
    %c0_108 = arith.constant 0 : index
    %c6_109 = arith.constant 6 : index
    %170 = memref.load %arg1[%c0_108, %c6_109] : memref<4x8xf32, #tpu.memory_space<smem>>
    %c0_110 = arith.constant 0 : index
    %c0_111 = arith.constant 0 : index
    %171 = vector.load %arg5[%c0_110, %c0_111] : memref<4x128xf32, #tpu.memory_space<vmem>>, vector<1x128xf32>
    %172 = vector.broadcast %170 : f32 to vector<1x128xf32>
    %173 = arith.mulf %172, %171 : vector<1x128xf32>
    %174 = vector.broadcast %169 : f32 to vector<1x128xf32>
    %175 = arith.addf %174, %173 : vector<1x128xf32>
    %c1_112 = arith.constant 1 : index
    %c6_113 = arith.constant 6 : index
    %176 = memref.load %arg1[%c1_112, %c6_113] : memref<4x8xf32, #tpu.memory_space<smem>>
    %c1_114 = arith.constant 1 : index
    %c0_115 = arith.constant 0 : index
    %177 = vector.load %arg5[%c1_114, %c0_115] : memref<4x128xf32, #tpu.memory_space<vmem>>, vector<1x128xf32>
    %178 = vector.broadcast %176 : f32 to vector<1x128xf32>
    %179 = arith.mulf %178, %177 : vector<1x128xf32>
    %180 = arith.addf %175, %179 : vector<1x128xf32>
    %c2_116 = arith.constant 2 : index
    %c6_117 = arith.constant 6 : index
    %181 = memref.load %arg1[%c2_116, %c6_117] : memref<4x8xf32, #tpu.memory_space<smem>>
    %c2_118 = arith.constant 2 : index
    %c0_119 = arith.constant 0 : index
    %182 = vector.load %arg5[%c2_118, %c0_119] : memref<4x128xf32, #tpu.memory_space<vmem>>, vector<1x128xf32>
    %183 = vector.broadcast %181 : f32 to vector<1x128xf32>
    %184 = arith.mulf %183, %182 : vector<1x128xf32>
    %185 = arith.addf %180, %184 : vector<1x128xf32>
    %c3_120 = arith.constant 3 : index
    %c6_121 = arith.constant 6 : index
    %186 = memref.load %arg1[%c3_120, %c6_121] : memref<4x8xf32, #tpu.memory_space<smem>>
    %c3_122 = arith.constant 3 : index
    %c0_123 = arith.constant 0 : index
    %187 = vector.load %arg5[%c3_122, %c0_123] : memref<4x128xf32, #tpu.memory_space<vmem>>, vector<1x128xf32>
    %188 = vector.broadcast %186 : f32 to vector<1x128xf32>
    %189 = arith.mulf %188, %187 : vector<1x128xf32>
    %190 = arith.addf %185, %189 : vector<1x128xf32>
    %c6_124 = arith.constant 6 : index
    %191 = memref.load %arg3[%c6_124] : memref<8xf32, #tpu.memory_space<smem>>
    %cst_125 = arith.constant 0.000000e+00 : f32
    %192 = vector.broadcast %cst_125 : f32 to vector<1x128xf32>
    %193 = arith.maximumf %190, %192 : vector<1x128xf32>
    %194 = vector.broadcast %191 : f32 to vector<1x128xf32>
    %195 = arith.mulf %194, %193 : vector<1x128xf32>
    %196 = arith.addf %168, %195 : vector<1x128xf32>
    %c7 = arith.constant 7 : index
    %197 = memref.load %arg2[%c7] : memref<8xf32, #tpu.memory_space<smem>>
    %c0_126 = arith.constant 0 : index
    %c7_127 = arith.constant 7 : index
    %198 = memref.load %arg1[%c0_126, %c7_127] : memref<4x8xf32, #tpu.memory_space<smem>>
    %c0_128 = arith.constant 0 : index
    %c0_129 = arith.constant 0 : index
    %199 = vector.load %arg5[%c0_128, %c0_129] : memref<4x128xf32, #tpu.memory_space<vmem>>, vector<1x128xf32>
    %200 = vector.broadcast %198 : f32 to vector<1x128xf32>
    %201 = arith.mulf %200, %199 : vector<1x128xf32>
    %202 = vector.broadcast %197 : f32 to vector<1x128xf32>
    %203 = arith.addf %202, %201 : vector<1x128xf32>
    %c1_130 = arith.constant 1 : index
    %c7_131 = arith.constant 7 : index
    %204 = memref.load %arg1[%c1_130, %c7_131] : memref<4x8xf32, #tpu.memory_space<smem>>
    %c1_132 = arith.constant 1 : index
    %c0_133 = arith.constant 0 : index
    %205 = vector.load %arg5[%c1_132, %c0_133] : memref<4x128xf32, #tpu.memory_space<vmem>>, vector<1x128xf32>
    %206 = vector.broadcast %204 : f32 to vector<1x128xf32>
    %207 = arith.mulf %206, %205 : vector<1x128xf32>
    %208 = arith.addf %203, %207 : vector<1x128xf32>
    %c2_134 = arith.constant 2 : index
    %c7_135 = arith.constant 7 : index
    %209 = memref.load %arg1[%c2_134, %c7_135] : memref<4x8xf32, #tpu.memory_space<smem>>
    %c2_136 = arith.constant 2 : index
    %c0_137 = arith.constant 0 : index
    %210 = vector.load %arg5[%c2_136, %c0_137] : memref<4x128xf32, #tpu.memory_space<vmem>>, vector<1x128xf32>
    %211 = vector.broadcast %209 : f32 to vector<1x128xf32>
    %212 = arith.mulf %211, %210 : vector<1x128xf32>
    %213 = arith.addf %208, %212 : vector<1x128xf32>
    %c3_138 = arith.constant 3 : index
    %c7_139 = arith.constant 7 : index
    %214 = memref.load %arg1[%c3_138, %c7_139] : memref<4x8xf32, #tpu.memory_space<smem>>
    %c3_140 = arith.constant 3 : index
    %c0_141 = arith.constant 0 : index
    %215 = vector.load %arg5[%c3_140, %c0_141] : memref<4x128xf32, #tpu.memory_space<vmem>>, vector<1x128xf32>
    %216 = vector.broadcast %214 : f32 to vector<1x128xf32>
    %217 = arith.mulf %216, %215 : vector<1x128xf32>
    %218 = arith.addf %213, %217 : vector<1x128xf32>
    %c7_142 = arith.constant 7 : index
    %219 = memref.load %arg3[%c7_142] : memref<8xf32, #tpu.memory_space<smem>>
    %cst_143 = arith.constant 0.000000e+00 : f32
    %220 = vector.broadcast %cst_143 : f32 to vector<1x128xf32>
    %221 = arith.maximumf %218, %220 : vector<1x128xf32>
    %222 = vector.broadcast %219 : f32 to vector<1x128xf32>
    %223 = arith.mulf %222, %221 : vector<1x128xf32>
    %224 = arith.addf %196, %223 : vector<1x128xf32>
    %c0_144 = arith.constant 0 : index
    %225 = memref.load %arg4[%c0_144] : memref<1xf32, #tpu.memory_space<smem>>
    %226 = vector.broadcast %225 : f32 to vector<1x128xf32>
    %227 = arith.addf %224, %226 : vector<1x128xf32>
    %c0_145 = arith.constant 0 : index
    %c0_146 = arith.constant 0 : index
    %228 = vector.load %arg6[%c0_145, %c0_146] : memref<1x128xf32, #tpu.memory_space<vmem>>, vector<1x128xf32>
    tpu.vector_store %arg6[%c0_145, %c0_146], %227 {strides = array<i32>} : memref<1x128xf32, #tpu.memory_space<vmem>>, vector<1x128xf32>,
    return
  }
  func.func @transform_0(%arg0: i32) -> (i32, i32) {
    %c0_i32 = arith.constant 0 : i32
    %c0_i32_0 = arith.constant 0 : i32
    %c0_i32_1 = arith.constant 0 : i32
    return %c0_i32, %c0_i32_0 : i32, i32
  }
  func.func @transform_1(%arg0: i32) -> i32 {
    %c0_i32 = arith.constant 0 : i32
    %c0_i32_0 = arith.constant 0 : i32
    return %c0_i32 : i32
  }
  func.func @transform_2(%arg0: i32) -> i32 {
    %c0_i32 = arith.constant 0 : i32
    %c0_i32_0 = arith.constant 0 : i32
    return %c0_i32 : i32
  }
  func.func @transform_3(%arg0: i32) -> i32 {
    %c0_i32 = arith.constant 0 : i32
    %c0_i32_0 = arith.constant 0 : i32
    return %c0_i32 : i32
  }
  func.func @transform_4(%arg0: i32) -> (i32, i32) {
    %c0_i32 = arith.constant 0 : i32
    %c0_i32_0 = arith.constant 0 : i32
    return %c0_i32, %arg0 : i32, i32
  }
  func.func @transform_5(%arg0: i32) -> (i32, i32) {
    %c0_i32 = arith.constant 0 : i32
    %c0_i32_0 = arith.constant 0 : i32
    return %c0_i32, %arg0 : i32, i32
  }
}

</mosaic_0001>

<llo_original>
// kernel: simple_house_net.1
$region0: #{simple_house_net.1}
  #allocation0 [shape = 'u32[]', space=smem, size = 0x4, offset = 0x4, fixed_abs, tag = 'smem constant byte address 0x4 - core index']
  #allocation1 [shape = 'u32[144,128]{1,0:T(1,128)}', space=vmem, size = 0x12000, scoped, tag = 'internal scratch']
  #allocation2 [shape = 'f32[1]{0:T(128)S(6)}', space=smem, size = 0x200, scoped, tag = 'scoped memory for simple_house_net.1']
  %s0 = inlined_call_operand.vmem [shape: f32[4,8], index: 0, kind: input, shape index: {}]
  %s1 = inlined_call_operand.vmem [shape: f32[8], index: 1, kind: input, shape index: {}]
  %s2 = inlined_call_operand.vmem [shape: f32[8], index: 2, kind: input, shape index: {}]
  %s3 = inlined_call_operand.<no memory space> [shape: f32[1], index: 3, kind: input, shape index: {}]
  %s4 = inlined_call_operand.vmem [shape: f32[4,128], index: 4, kind: input, shape index: {}]
  %s5 = inlined_call_operand.vmem [shape: f32[1,128], index: 5, kind: output, shape index: {}]
  %s6 = sld [smem:[#allocation0]]
  $region42: #{simple_house_net.1} parent=0
    _
  %s8 = ssub.s32 1, %s6
  %s9 = scalar_select 0, %s8, %s6
  %10 = sst [smem:[#allocation2]] %s3
  $region1: #{simple_house_net.1} parent=0
    #allocation3 [shape = 'u8[2048]{0}', space=smem, size = 0x800, scoped, tag = 'input window, operand 0, single buffered']
    #allocation4 [shape = 's32[1]{0}', space=sflag, size = 0x4, scoped, tag = 'scoped memory for simple_house_net.1']
    #allocation5 [shape = 'u8[512]{0}', space=smem, size = 0x200, scoped, tag = 'input window, operand 1, single buffered']
    #allocation6 [shape = 's32[1]{0}', space=sflag, size = 0x4, scoped, tag = 'scoped memory for simple_house_net.1']
    #allocation7 [shape = 'u8[512]{0}', space=smem, size = 0x200, scoped, tag = 'input window, operand 2, single buffered']
    %11 = vsyncpa [#allocation4], 0
    %12 = vsyncpa [#allocation6], 0
    // Predicated region
    $region2: #{simple_house_net.1} parent=1 // pred_check
      _
    $region3: #{simple_house_net.1} parent=1 // pred_check_branch
      %14 = sbr.rel (0) target = $region5
    $region4: #{simple_house_net.1} parent=1 // pred_region
      %s16 = ssub.s32 64, 64
      %17 = vsyncadd [#allocation4], %s16
      %s19 = sshll.u32 %s0, 4
      %s20 = int_to_ptr.vmem [resolvable:$true] %s19
      %22 = dma.vmem_to_smem %s20, 64, [#allocation3], [#allocation4]
    $region5: #{simple_house_net.1} parent=1 // pred_fallthru
      _
    // Predicated region
    $region6: #{simple_house_net.1} parent=1 // pred_check
      _
    $region7: #{simple_house_net.1} parent=1 // pred_check_branch
      %24 = sbr.rel (0) target = $region9
    $region8: #{simple_house_net.1} parent=1 // pred_region
      %s26 = ssub.s32 16, 16
      %27 = vsyncadd [#allocation6], %s26
      %s29 = sshll.u32 %s1, 4
      %s30 = int_to_ptr.vmem [resolvable:$true] %s29
      %32 = dma.vmem_to_smem %s30, 16, [#allocation5], [#allocation6]
    $region9: #{simple_house_net.1} parent=1 // pred_fallthru
      _
    // Predicated region
    $region10: #{simple_house_net.1} parent=1 // pred_check
      _
    $region11: #{simple_house_net.1} parent=1 // pred_check_branch
      %34 = sbr.rel (0) target = $region13
    $region12: #{simple_house_net.1} parent=1 // pred_region
      %s36 = ssub.s32 16, 16
      %37 = vsyncadd [#allocation6], %s36
      %s39 = sshll.u32 %s2, 4
      %s40 = int_to_ptr.vmem [resolvable:$true] %s39
      %42 = dma.vmem_to_smem %s40, 16, [#allocation7], [#allocation6]
    $region13: #{simple_house_net.1} parent=1 // pred_fallthru
      _
    // Predicated region
    $region14: #{simple_house_net.1} parent=1 // pred_check
      _
    $region15: #{simple_house_net.1} parent=1 // pred_check_branch
      %44 = sbr.rel (0) target = $region17
    $region16: #{simple_house_net.1} parent=1 // pred_region
      _
    $region17: #{simple_house_net.1} parent=1 // pred_fallthru
      _
    // Predicated region
    $region18: #{simple_house_net.1} parent=1 // pred_check
      _
    $region19: #{simple_house_net.1} parent=1 // pred_check_branch
      %46 = sbr.rel (0) target = $region21
    $region20: #{simple_house_net.1} parent=1 // pred_region
      _
    $region21: #{simple_house_net.1} parent=1 // pred_fallthru
      _
    // Predicated region
    $region22: #{simple_house_net.1} parent=1 // pred_check
      _
    $region23: #{simple_house_net.1} parent=1 // pred_check_branch
      %48 = sbr.rel (0) target = $region25
    $region24: #{simple_house_net.1} parent=1 // pred_region
      %49 = dma.done [#allocation4], 64
    $region25: #{simple_house_net.1} parent=1 // pred_fallthru
      _
    // Predicated region
    $region26: #{simple_house_net.1} parent=1 // pred_check
      _
    $region27: #{simple_house_net.1} parent=1 // pred_check_branch
      %51 = sbr.rel (0) target = $region29
    $region28: #{simple_house_net.1} parent=1 // pred_region
      %52 = dma.done [#allocation6], 16
    $region29: #{simple_house_net.1} parent=1 // pred_fallthru
      _
    // Predicated region
    $region30: #{simple_house_net.1} parent=1 // pred_check
      _
    $region31: #{simple_house_net.1} parent=1 // pred_check_branch
      %54 = sbr.rel (0) target = $region33
    $region32: #{simple_house_net.1} parent=1 // pred_region
      %55 = dma.done [#allocation6], 16
    $region33: #{simple_house_net.1} parent=1 // pred_fallthru
      _
    %56 = sfence
    %s57 = sld [smem:[#allocation5]]
    %s58 = sld [smem:[#allocation3]]
    %v59 = vld [vmem:[%s4] sm:$0x1]
    %v60 = vstv %s58
    %v61 = vmul.f32 %v60, %v59
    %v62 = vstv %s57
    %v63 = vadd.f32 %v62, %v61
    %s64 = sld [smem:[#allocation3 + $0x80]]
    %v65 = vld [vmem:[%s4 + $0x1] sm:$0x1]
    %v66 = vstv %s64
    %v67 = vmul.f32 %v66, %v65
    %v68 = vadd.f32 %v63, %v67
    %s69 = sld [smem:[#allocation3 + $0x100]]
    %v70 = vld [vmem:[%s4 + $0x2] sm:$0x1]
    %v71 = vstv %s69
    %v72 = vmul.f32 %v71, %v70
    %v73 = vadd.f32 %v68, %v72
    %s74 = sld [smem:[#allocation3 + $0x180]]
    %v75 = vld [vmem:[%s4 + $0x3] sm:$0x1]
    %v76 = vstv %s74
    %v77 = vmul.f32 %v76, %v75
    %v78 = vadd.f32 %v73, %v77
    %s79 = sld [smem:[#allocation7]]
    %v80 = vmax.f32 %v78, 0.0
    %v81 = vstv %s79
    %v82 = vmul.f32 %v81, %v80
    %v83 = vadd.f32 %v82, 0.0
    %s84 = sld [smem:[#allocation5 + $0x1]]
    %s85 = sld [smem:[#allocation3 + $0x1]]
    %v86 = vstv %s85
    %v87 = vmul.f32 %v86, %v59
    %v88 = vstv %s84
    %v89 = vadd.f32 %v88, %v87
    %s90 = sld [smem:[#allocation3 + $0x81]]
    %v91 = vstv %s90
    %v92 = vmul.f32 %v91, %v65
    %v93 = vadd.f32 %v89, %v92
    %s94 = sld [smem:[#allocation3 + $0x101]]
    %v95 = vstv %s94
    %v96 = vmul.f32 %v95, %v70
    %v97 = vadd.f32 %v93, %v96
    %s98 = sld [smem:[#allocation3 + $0x181]]
    %v99 = vstv %s98
    %v100 = vmul.f32 %v99, %v75
    %v101 = vadd.f32 %v97, %v100
    %s102 = sld [smem:[#allocation7 + $0x1]]
    %v103 = vmax.f32 %v101, 0.0
    %v104 = vstv %s102
    %v105 = vmul.f32 %v104, %v103
    %v106 = vadd.f32 %v83, %v105
    %s107 = sld [smem:[#allocation5 + $0x2]]
    %s108 = sld [smem:[#allocation3 + $0x2]]
    %v109 = vstv %s108
    %v110 = vmul.f32 %v109, %v59
    %v111 = vstv %s107
    %v112 = vadd.f32 %v111, %v110
    %s113 = sld [smem:[#allocation3 + $0x82]]
    %v114 = vstv %s113
    %v115 = vmul.f32 %v114, %v65
    %v116 = vadd.f32 %v112, %v115
    %s117 = sld [smem:[#allocation3 + $0x102]]
    %v118 = vstv %s117
    %v119 = vmul.f32 %v118, %v70
    %v120 = vadd.f32 %v116, %v119
    %s121 = sld [smem:[#allocation3 + $0x182]]
    %v122 = vstv %s121
    %v123 = vmul.f32 %v122, %v75
    %v124 = vadd.f32 %v120, %v123
    %s125 = sld [smem:[#allocation7 + $0x2]]
    %v126 = vmax.f32 %v124, 0.0
    %v127 = vstv %s125
    %v128 = vmul.f32 %v127, %v126
    %v129 = vadd.f32 %v106, %v128
    %s130 = sld [smem:[#allocation5 + $0x3]]
    %s131 = sld [smem:[#allocation3 + $0x3]]
    %v132 = vstv %s131
    %v133 = vmul.f32 %v132, %v59
    %v134 = vstv %s130
    %v135 = vadd.f32 %v134, %v133
    %s136 = sld [smem:[#allocation3 + $0x83]]
    %v137 = vstv %s136
    %v138 = vmul.f32 %v137, %v65
    %v139 = vadd.f32 %v135, %v138
    %s140 = sld [smem:[#allocation3 + $0x103]]
    %v141 = vstv %s140
    %v142 = vmul.f32 %v141, %v70
    %v143 = vadd.f32 %v139, %v142
    %s144 = sld [smem:[#allocation3 + $0x183]]
    %v145 = vstv %s144
    %v146 = vmul.f32 %v145, %v75
    %v147 = vadd.f32 %v143, %v146
    %s148 = sld [smem:[#allocation7 + $0x3]]
    %v149 = vmax.f32 %v147, 0.0
    %v150 = vstv %s148
    %v151 = vmul.f32 %v150, %v149
    %v152 = vadd.f32 %v129, %v151
    %s153 = sld [smem:[#allocation5 + $0x4]]
    %s154 = sld [smem:[#allocation3 + $0x4]]
    %v155 = vstv %s154
    %v156 = vmul.f32 %v155, %v59
    %v157 = vstv %s153
    %v158 = vadd.f32 %v157, %v156
    %s159 = sld [smem:[#allocation3 + $0x84]]
    %v160 = vstv %s159
    %v161 = vmul.f32 %v160, %v65
    %v162 = vadd.f32 %v158, %v161
    %s163 = sld [smem:[#allocation3 + $0x104]]
    %v164 = vstv %s163
    %v165 = vmul.f32 %v164, %v70
    %v166 = vadd.f32 %v162, %v165
    %s167 = sld [smem:[#allocation3 + $0x184]]
    %v168 = vstv %s167
    %v169 = vmul.f32 %v168, %v75
    %v170 = vadd.f32 %v166, %v169
    %s171 = sld [smem:[#allocation7 + $0x4]]
    %v172 = vmax.f32 %v170, 0.0
    %v173 = vstv %s171
    %v174 = vmul.f32 %v173, %v172
    %v175 = vadd.f32 %v152, %v174
    %s176 = sld [smem:[#allocation5 + $0x5]]
    %s177 = sld [smem:[#allocation3 + $0x5]]
    %v178 = vstv %s177
    %v179 = vmul.f32 %v178, %v59
    %v180 = vstv %s176
    %v181 = vadd.f32 %v180, %v179
    %s182 = sld [smem:[#allocation3 + $0x85]]
    %v183 = vstv %s182
    %v184 = vmul.f32 %v183, %v65
    %v185 = vadd.f32 %v181, %v184
    %s186 = sld [smem:[#allocation3 + $0x105]]
    %v187 = vstv %s186
    %v188 = vmul.f32 %v187, %v70
    %v189 = vadd.f32 %v185, %v188
    %s190 = sld [smem:[#allocation3 + $0x185]]
    %v191 = vstv %s190
    %v192 = vmul.f32 %v191, %v75
    %v193 = vadd.f32 %v189, %v192
    %s194 = sld [smem:[#allocation7 + $0x5]]
    %v195 = vmax.f32 %v193, 0.0
    %v196 = vstv %s194
    %v197 = vmul.f32 %v196, %v195
    %v198 = vadd.f32 %v175, %v197
    %s199 = sld [smem:[#allocation5 + $0x6]]
    %s200 = sld [smem:[#allocation3 + $0x6]]
    %v201 = vstv %s200
    %v202 = vmul.f32 %v201, %v59
    %v203 = vstv %s199
    %v204 = vadd.f32 %v203, %v202
    %s205 = sld [smem:[#allocation3 + $0x86]]
    %v206 = vstv %s205
    %v207 = vmul.f32 %v206, %v65
    %v208 = vadd.f32 %v204, %v207
    %s209 = sld [smem:[#allocation3 + $0x106]]
    %v210 = vstv %s209
    %v211 = vmul.f32 %v210, %v70
    %v212 = vadd.f32 %v208, %v211
    %s213 = sld [smem:[#allocation3 + $0x186]]
    %v214 = vstv %s213
    %v215 = vmul.f32 %v214, %v75
    %v216 = vadd.f32 %v212, %v215
    %s217 = sld [smem:[#allocation7 + $0x6]]
    %v218 = vmax.f32 %v216, 0.0
    %v219 = vstv %s217
    %v220 = vmul.f32 %v219, %v218
    %v221 = vadd.f32 %v198, %v220
    %s222 = sld [smem:[#allocation5 + $0x7]]
    %s223 = sld [smem:[#allocation3 + $0x7]]
    %v224 = vstv %s223
    %v225 = vmul.f32 %v224, %v59
    %v226 = vstv %s222
    %v227 = vadd.f32 %v226, %v225
    %s228 = sld [smem:[#allocation3 + $0x87]]
    %v229 = vstv %s228
    %v230 = vmul.f32 %v229, %v65
    %v231 = vadd.f32 %v227, %v230
    %s232 = sld [smem:[#allocation3 + $0x107]]
    %v233 = vstv %s232
    %v234 = vmul.f32 %v233, %v70
    %v235 = vadd.f32 %v231, %v234
    %s236 = sld [smem:[#allocation3 + $0x187]]
    %v237 = vstv %s236
    %v238 = vmul.f32 %v237, %v75
    %v239 = vadd.f32 %v235, %v238
    %s240 = sld [smem:[#allocation7 + $0x7]]
    %v241 = vmax.f32 %v239, 0.0
    %v242 = vstv %s240
    %v243 = vmul.f32 %v242, %v241
    %v244 = vadd.f32 %v221, %v243
    %s245 = sld [smem:[#allocation2]]
    %v246 = vstv %s245
    %v247 = vadd.f32 %v244, %v246
    %248 = vst [vmem:[%s5] sm:$0x1] %v247
    // Predicated region
    $region34: #{simple_house_net.1} parent=1 // pred_check
      _
    $region35: #{simple_house_net.1} parent=1 // pred_check_branch
      %250 = sbr.rel (0) target = $region37
    $region36: #{simple_house_net.1} parent=1 // pred_region
      _
    $region37: #{simple_house_net.1} parent=1 // pred_fallthru
      _
    // Predicated region
    $region38: #{simple_house_net.1} parent=1 // pred_check
      _
    $region39: #{simple_house_net.1} parent=1 // pred_check_branch
      %252 = sbr.rel (0) target = $region41
    $region40: #{simple_house_net.1} parent=1 // pred_region
      _
    $region41: #{simple_house_net.1} parent=1 // pred_fallthru
      _
    %253 = vsyncpa [#allocation4], 1
    %254 = vsyncpa [#allocation6], 1

</llo_original>
